<compile_context>
chip_gen: v7x
topology: tpu7x:2x2x1
jax: 0.10.0
libtpu: 0.0.40
codegen_flags: <defaults>
</compile_context>

<pallas_src>
import functools

import jax
import jax.numpy as jnp
from jax.experimental import pallas as pl
from jax.experimental.pallas import tpu as pltpu


def _round_up(a, m):
    return ((a + m - 1) // m) * m


def _rfm_kernel(x_ref, w_ref, b_ref, o_ref):
    # Normalization is pre-folded into W'/b' by the wrapper.  K (= input_dim)
    # is tiny, so the contraction is done on the VPU as K rank-1 outer-product
    # FMAs instead of feeding a lane-sparse (tm, K) operand to the MXU.
    x = x_ref[...]                                   # (tm, K)  f32
    w = w_ref[...]                                   # (K, tn)  f32
    k_dim = x.shape[1]
    acc = b_ref[...] + x[:, 0:1] * w[0:1, :]         # (tm, tn) f32
    for k in range(1, k_dim):                        # static tiny loop (K==2)
        acc = acc + x[:, k:k + 1] * w[k:k + 1, :]
    # TODO(synk): on v6e/v7x tanh could run in bf16 on the EUP (~2x transcend.
    # throughput) once the output is bf16; kept f32 for accuracy + v5e compat.
    o_ref[...] = jnp.tanh(acc).astype(o_ref.dtype)


def fold_rfm_params(w_t, b, r_n_1, x_n):
    """Fold the affine normalization into the Linear params (do once, reuse).

    (r*(x - c)) @ W^T + b  ==  x @ (r[:,None]*W^T) + (b - (r*c) @ W^T)
    """
    w_fold = (r_n_1[:, None] * w_t).astype(jnp.float32)
    b_fold = (b - (r_n_1 * x_n) @ w_t).astype(jnp.float32)
    return w_fold, b_fold


def _is_multi_tensorcore():
    # v7x has 2 TensorCores per chip; on v5e/v6e the grid is a serial loop so
    # splitting a tile that already fits just adds a grid-step of overhead.
    try:
        kind = jax.devices()[0].device_kind.lower()
    except Exception:
        return False
    return "v7" in kind or "7x" in kind


@functools.partial(jax.jit, static_argnames=("tile_m", "tile_n", "out_dtype"))
def rfm_forward_folded(x, w_fold, b_fold, *, tile_m=1024, tile_n=1024,
                       out_dtype=None):
    """Core forward: tanh(x @ W' + b') with pre-folded params.

    x: [N, input_dim] f32, w_fold: [input_dim, J_n] f32, b_fold: [J_n] f32.
    """
    n, input_dim = x.shape
    j_n = w_fold.shape[1]
    out_dtype = x.dtype if out_dtype is None else out_dtype

    # ---- J (lane) tiling: lane-dense output (multiples of 128), balanced
    # tiles so padding waste is bounded by <128 cols per tile.
    j_128 = _round_up(j_n, 128)
    tn_cap = max(128, _round_up(tile_n, 128))
    num_j_tiles = max(1, pl.cdiv(j_128, tn_cap))
    tn = _round_up(pl.cdiv(j_128, num_j_tiles), 128)
    j_pad = num_j_tiles * tn

    # ---- batch (sublane) tiling: balanced tiles (waste < 8 rows per tile);
    # force >= 2 tiles only on multi-TensorCore parts (v7x) so both TCs work.
    min_m_tiles = 2 if (_is_multi_tensorcore() and n > 8) else 1
    num_m_tiles = max(pl.cdiv(n, max(8, tile_m)), min_m_tiles)
    tm = _round_up(pl.cdiv(n, num_m_tiles), 8)
    n_pad = num_m_tiles * tm

    # Pad only when strictly required (padding implies one extra slice copy
    # after the call; the aligned common case has zero extra HBM traffic).
    if j_pad != j_n:
        w_fold = jnp.pad(w_fold, ((0, 0), (0, j_pad - j_n)))
        b_fold = jnp.pad(b_fold, (0, j_pad - j_n))
    b2 = b_fold.reshape(1, j_pad)
    x_in = jnp.pad(x, ((0, n_pad - n), (0, 0))) if n_pad != n else x

    # Grid: batch axis innermost -> the folded W / b block index is invariant
    # along the inner loop, so Pallas does not re-DMA them every step.
    out = pl.pallas_call(
        _rfm_kernel,
        out_shape=jax.ShapeDtypeStruct((n_pad, j_pad), out_dtype),
        grid_spec=pl.GridSpec(
            grid=(num_j_tiles, num_m_tiles),
            in_specs=[
                pl.BlockSpec((tm, input_dim), lambda j, i: (i, 0)),   # x tile
                pl.BlockSpec((input_dim, tn), lambda j, i: (0, j)),   # folded W
                pl.BlockSpec((1, tn), lambda j, i: (0, j)),           # folded b
            ],
            out_specs=pl.BlockSpec((tm, tn), lambda j, i: (i, j)),
        ),
        compiler_params=pltpu.CompilerParams(
            dimension_semantics=("parallel", "parallel"),
        ),
    )(x_in, w_fold, b2)

    if n_pad != n or j_pad != j_n:
        out = out[:n, :j_n]
    return out


def rfm_forward(x, w_t, b, r_n_1, x_n, *, tile_m=1024, tile_n=1024,
                out_dtype=None):
    """Convenience wrapper matching RFM.forward (folds params per call)."""
    w_fold, b_fold = fold_rfm_params(w_t, b, r_n_1, x_n)
    return rfm_forward_folded(x, w_fold, b_fold, tile_m=tile_m, tile_n=tile_n,
                              out_dtype=out_dtype)


def make_rfm_params(key, input_dim, j_n):
    """Deterministic init mimicking nn.Linear default (uniform +/- 1/sqrt(in))."""
    kw, kb = jax.random.split(key)
    bound = 1.0 / jnp.sqrt(jnp.float32(input_dim))
    # PyTorch weight is [out, in]; we store it pre-transposed as [in, out].
    w_t = jax.random.uniform(kw, (input_dim, j_n), jnp.float32, -bound, bound)
    b = jax.random.uniform(kb, (j_n,), jnp.float32, -bound, bound)
    return w_t, b


def rfm_reference(x, w_t, b, r_n_1, x_n):
    x_norm = r_n_1[None, :] * (x - x_n[None, :])
    return jnp.tanh(x_norm @ w_t + b[None, :])


if __name__ == "__main__":
    # Module hyperparameters (consistent with RFM(input_dim=2, J_n=...)).
    input_dim = 2
    j_n = 128
    x_max, x_min = 8.0, 0.0     # spatial domain of the beam
    t_max, t_min = 1.0, 0.0     # time domain
    n = 256                     # number of collocation points (batch)

    r_n_1 = jnp.array([2.0 / (x_max - x_min), 2.0 / (t_max - t_min)],
                      dtype=jnp.float32)
    x_n = jnp.array([(x_max + x_min) / 2.0, (t_max + t_min) / 2.0],
                    dtype=jnp.float32)

    key = jax.random.PRNGKey(0)
    k_in, k_p = jax.random.split(key)
    # Collocation points in [x_min, x_max] x [t_min, t_max].
    u = jax.random.uniform(k_in, (n, input_dim), jnp.float32)
    x = u * jnp.array([x_max - x_min, t_max - t_min]) + jnp.array([x_min, t_min])

    w_t, b = make_rfm_params(k_p, input_dim, j_n)

    # Fold the normalization once (reused across calls in a collocation loop).
    w_fold, b_fold = fold_rfm_params(w_t, b, r_n_1, x_n)

    ref = rfm_reference(x, w_t, b, r_n_1, x_n)

    # f32 validation path (strict check against the reference).
    out = jax.block_until_ready(rfm_forward_folded(x, w_fold, b_fold))
    assert out.shape == (n, j_n)
    assert jnp.allclose(out, ref, atol=1e-5, rtol=1e-5), "f32 mismatch vs reference"

    # bf16 production path (halves the dominant HBM writeback); loose check.
    out_bf16 = jax.block_until_ready(
        rfm_forward_folded(x, w_fold, b_fold, out_dtype=jnp.bfloat16))
    assert out_bf16.shape == (n, j_n) and out_bf16.dtype == jnp.bfloat16
    assert jnp.allclose(out_bf16.astype(jnp.float32), ref,
                        atol=1.5e-2, rtol=1.5e-2), "bf16 mismatch vs reference"

    print("KERNEL_OK")
</pallas_src>

<mosaic_0001>
module attributes {stable_mosaic.version = 11 : i64} {
  func.func @_rfm_kernel(%arg0: i32, %arg1: i32, %arg2: memref<256x2xf32, #tpu.memory_space<vmem>>, %arg3: memref<2x128xf32, #tpu.memory_space<vmem>>, %arg4: memref<1x128xf32, #tpu.memory_space<vmem>>, %arg5: memref<256x128xf32, #tpu.memory_space<vmem>>) attributes {dimension_semantics = [#tpu.dimension_semantics<parallel>, #tpu.dimension_semantics<parallel>], iteration_bounds = array<i64: 1, 1>, scalar_prefetch = 0 : i64, scratch_operands = 0 : i64, tpu.core_type = #tpu.core_type<tc>, window_params = [{transform_indices = @transform_0, window_bounds = array<i64: 256, 2>}, {transform_indices = @transform_1, window_bounds = array<i64: 2, 128>}, {transform_indices = @transform_2, window_bounds = array<i64: 1, 128>}, {transform_indices = @transform_3, window_bounds = array<i64: 256, 128>}]} {
    %c0 = arith.constant 0 : index
    %c0_0 = arith.constant 0 : index
    %0 = vector.load %arg2[%c0, %c0_0] : memref<256x2xf32, #tpu.memory_space<vmem>>, vector<256x2xf32>
    %c0_1 = arith.constant 0 : index
    %c0_2 = arith.constant 0 : index
    %1 = vector.load %arg3[%c0_1, %c0_2] : memref<2x128xf32, #tpu.memory_space<vmem>>, vector<2x128xf32>
    %c0_3 = arith.constant 0 : index
    %c0_4 = arith.constant 0 : index
    %2 = vector.load %arg4[%c0_3, %c0_4] : memref<1x128xf32, #tpu.memory_space<vmem>>, vector<1x128xf32>
    %3 = vector.extract_strided_slice %0 {offsets = [0, 0], sizes = [256, 1], strides = [1, 1]} : vector<256x2xf32> to vector<256x1xf32>
    %4 = vector.extract_strided_slice %1 {offsets = [0, 0], sizes = [1, 128], strides = [1, 1]} : vector<2x128xf32> to vector<1x128xf32>
    %5 = vector.broadcast %3 : vector<256x1xf32> to vector<256x128xf32>
    %6 = vector.broadcast %4 : vector<1x128xf32> to vector<256x128xf32>
    %7 = arith.mulf %5, %6 : vector<256x128xf32>
    %8 = vector.broadcast %2 : vector<1x128xf32> to vector<256x128xf32>
    %9 = arith.addf %8, %7 : vector<256x128xf32>
    %10 = vector.extract_strided_slice %0 {offsets = [0, 1], sizes = [256, 1], strides = [1, 1]} : vector<256x2xf32> to vector<256x1xf32>
    %11 = vector.extract_strided_slice %1 {offsets = [1, 0], sizes = [1, 128], strides = [1, 1]} : vector<2x128xf32> to vector<1x128xf32>
    %12 = vector.broadcast %10 : vector<256x1xf32> to vector<256x128xf32>
    %13 = vector.broadcast %11 : vector<1x128xf32> to vector<256x128xf32>
    %14 = arith.mulf %12, %13 : vector<256x128xf32>
    %15 = arith.addf %9, %14 : vector<256x128xf32>
    %16 = math.tanh %15 : vector<256x128xf32>
    %c0_5 = arith.constant 0 : index
    %c0_6 = arith.constant 0 : index
    %17 = vector.load %arg5[%c0_5, %c0_6] : memref<256x128xf32, #tpu.memory_space<vmem>>, vector<256x128xf32>
    tpu.vector_store %arg5[%c0_5, %c0_6], %16 {strides = array<i32>} : memref<256x128xf32, #tpu.memory_space<vmem>>, vector<256x128xf32>,
    return
  }
  func.func @transform_0(%arg0: i32, %arg1: i32) -> (i32, i32) {
    %c0_i32 = arith.constant 0 : i32
    %c0_i32_0 = arith.constant 0 : i32
    return %arg1, %c0_i32 : i32, i32
  }
  func.func @transform_1(%arg0: i32, %arg1: i32) -> (i32, i32) {
    %c0_i32 = arith.constant 0 : i32
    %c0_i32_0 = arith.constant 0 : i32
    return %c0_i32, %arg0 : i32, i32
  }
  func.func @transform_2(%arg0: i32, %arg1: i32) -> (i32, i32) {
    %c0_i32 = arith.constant 0 : i32
    %c0_i32_0 = arith.constant 0 : i32
    return %c0_i32, %arg0 : i32, i32
  }
  func.func @transform_3(%arg0: i32, %arg1: i32) -> (i32, i32) {
    %c0_i32 = arith.constant 0 : i32
    return %arg1, %arg0 : i32, i32
  }
}

</mosaic_0001>

<llo_original>
// kernel: rfm_forward_folded.1
$region0: #{rfm_forward_folded.1}
  #allocation0 [shape = 'u32[]', space=smem, size = 0x4, offset = 0x4, fixed_abs, tag = 'smem constant byte address 0x4 - core index']
  #allocation1 [shape = 'u32[144,128]{1,0:T(1,128)}', space=vmem, size = 0x12000, scoped, tag = 'internal scratch']
  %s0 = inlined_call_operand.vmem [shape: f32[256,2], index: 0, kind: input, shape index: {}]
  %s1 = inlined_call_operand.vmem [shape: f32[2,128], index: 1, kind: input, shape index: {}]
  %s2 = inlined_call_operand.vmem [shape: f32[1,128], index: 2, kind: input, shape index: {}]
  %s3 = inlined_call_operand.hbm [shape: f32[256,128], index: 3, kind: output, shape index: {}]
  %s4 = sld [smem:[#allocation0]]
  $region22: #{rfm_forward_folded.1} parent=0
    _
  %s6 = ssub.s32 1, %s4
  %s7 = scalar_select 0, %s6, %s4
  $region1: #{rfm_forward_folded.1} parent=0
    #allocation2 [shape = 'u8[131072]{0}', space=vmem, size = 0x20000, scoped, tag = 'output window, operand 0, single buffered']
    #allocation3 [shape = 's32[1]{0}', space=sflag, size = 0x4, scoped, tag = 'scoped memory for rfm_forward_folded.1']
    %8 = vsyncpa [#allocation3], 0
    // Predicated region
    $region2: #{rfm_forward_folded.1} parent=1 // pred_check
      _
    $region3: #{rfm_forward_folded.1} parent=1 // pred_check_branch
      %10 = sbr.rel (0) target = $region5
    $region4: #{rfm_forward_folded.1} parent=1 // pred_region
      _
    $region5: #{rfm_forward_folded.1} parent=1 // pred_fallthru
      _
    // Predicated region
    $region6: #{rfm_forward_folded.1} parent=1 // pred_check
      _
    $region7: #{rfm_forward_folded.1} parent=1 // pred_check_branch
      %12 = sbr.rel (0) target = $region9
    $region8: #{rfm_forward_folded.1} parent=1 // pred_region
      _
    $region9: #{rfm_forward_folded.1} parent=1 // pred_fallthru
      _
    // Predicated region
    $region10: #{rfm_forward_folded.1} parent=1 // pred_check
      _
    $region11: #{rfm_forward_folded.1} parent=1 // pred_check_branch
      %14 = sbr.rel (0) target = $region13
    $region12: #{rfm_forward_folded.1} parent=1 // pred_region
      _
    $region13: #{rfm_forward_folded.1} parent=1 // pred_fallthru
      _
    %v15 = vld [vmem:[%s0] sm:$0xff]
    %v16 = vld [vmem:[%s0 + $0x8] sm:$0xff]
    %v17 = vld [vmem:[%s0 + $0x10] sm:$0xff]
    %v18 = vld [vmem:[%s0 + $0x18] sm:$0xff]
    %v19 = vld [vmem:[%s0 + $0x20] sm:$0xff]
    %v20 = vld [vmem:[%s0 + $0x28] sm:$0xff]
    %v21 = vld [vmem:[%s0 + $0x30] sm:$0xff]
    %v22 = vld [vmem:[%s0 + $0x38] sm:$0xff]
    %v23 = vld [vmem:[%s0 + $0x40] sm:$0xff]
    %v24 = vld [vmem:[%s0 + $0x48] sm:$0xff]
    %v25 = vld [vmem:[%s0 + $0x50] sm:$0xff]
    %v26 = vld [vmem:[%s0 + $0x58] sm:$0xff]
    %v27 = vld [vmem:[%s0 + $0x60] sm:$0xff]
    %v28 = vld [vmem:[%s0 + $0x68] sm:$0xff]
    %v29 = vld [vmem:[%s0 + $0x70] sm:$0xff]
    %v30 = vld [vmem:[%s0 + $0x78] sm:$0xff]
    %v31 = vld [vmem:[%s0 + $0x80] sm:$0xff]
    %v32 = vld [vmem:[%s0 + $0x88] sm:$0xff]
    %v33 = vld [vmem:[%s0 + $0x90] sm:$0xff]
    %v34 = vld [vmem:[%s0 + $0x98] sm:$0xff]
    %v35 = vld [vmem:[%s0 + $0xa0] sm:$0xff]
    %v36 = vld [vmem:[%s0 + $0xa8] sm:$0xff]
    %v37 = vld [vmem:[%s0 + $0xb0] sm:$0xff]
    %v38 = vld [vmem:[%s0 + $0xb8] sm:$0xff]
    %v39 = vld [vmem:[%s0 + $0xc0] sm:$0xff]
    %v40 = vld [vmem:[%s0 + $0xc8] sm:$0xff]
    %v41 = vld [vmem:[%s0 + $0xd0] sm:$0xff]
    %v42 = vld [vmem:[%s0 + $0xd8] sm:$0xff]
    %v43 = vld [vmem:[%s0 + $0xe0] sm:$0xff]
    %v44 = vld [vmem:[%s0 + $0xe8] sm:$0xff]
    %v45 = vld [vmem:[%s0 + $0xf0] sm:$0xff]
    %v46 = vld [vmem:[%s0 + $0xf8] sm:$0xff]
    %v47 = vld [vmem:[%s1] sm:$0x3]
    %v48 = vld [vmem:[%s2] sm:$0x1]
    %50 = vset.pattern.permute.xlu0 0
    %51 = vperm.xlu0 %50, %v15
    %v52 = vpop.permute.xlu0 %51
    %55 = vset.pattern.permute.xlu0 0
    %56 = vperm.xlu0 %55, %v16
    %v57 = vpop.permute.xlu0 %56
    %60 = vset.pattern.permute.xlu0 0
    %61 = vperm.xlu0 %60, %v17
    %v62 = vpop.permute.xlu0 %61
    %65 = vset.pattern.permute.xlu0 0
    %66 = vperm.xlu0 %65, %v18
    %v67 = vpop.permute.xlu0 %66
    %70 = vset.pattern.permute.xlu0 0
    %71 = vperm.xlu0 %70, %v19
    %v72 = vpop.permute.xlu0 %71
    %75 = vset.pattern.permute.xlu0 0
    %76 = vperm.xlu0 %75, %v20
    %v77 = vpop.permute.xlu0 %76
    %80 = vset.pattern.permute.xlu0 0
    %81 = vperm.xlu0 %80, %v21
    %v82 = vpop.permute.xlu0 %81
    %85 = vset.pattern.permute.xlu0 0
    %86 = vperm.xlu0 %85, %v22
    %v87 = vpop.permute.xlu0 %86
    %90 = vset.pattern.permute.xlu0 0
    %91 = vperm.xlu0 %90, %v23
    %v92 = vpop.permute.xlu0 %91
    %95 = vset.pattern.permute.xlu0 0
    %96 = vperm.xlu0 %95, %v24
    %v97 = vpop.permute.xlu0 %96
    %100 = vset.pattern.permute.xlu0 0
    %101 = vperm.xlu0 %100, %v25
    %v102 = vpop.permute.xlu0 %101
    %105 = vset.pattern.permute.xlu0 0
    %106 = vperm.xlu0 %105, %v26
    %v107 = vpop.permute.xlu0 %106
    %110 = vset.pattern.permute.xlu0 0
    %111 = vperm.xlu0 %110, %v27
    %v112 = vpop.permute.xlu0 %111
    %115 = vset.pattern.permute.xlu0 0
    %116 = vperm.xlu0 %115, %v28
    %v117 = vpop.permute.xlu0 %116
    %120 = vset.pattern.permute.xlu0 0
    %121 = vperm.xlu0 %120, %v29
    %v122 = vpop.permute.xlu0 %121
    %125 = vset.pattern.permute.xlu0 0
    %126 = vperm.xlu0 %125, %v30
    %v127 = vpop.permute.xlu0 %126
    %130 = vset.pattern.permute.xlu0 0
    %131 = vperm.xlu0 %130, %v31
    %v132 = vpop.permute.xlu0 %131
    %135 = vset.pattern.permute.xlu0 0
    %136 = vperm.xlu0 %135, %v32
    %v137 = vpop.permute.xlu0 %136
    %140 = vset.pattern.permute.xlu0 0
    %141 = vperm.xlu0 %140, %v33
    %v142 = vpop.permute.xlu0 %141
    %145 = vset.pattern.permute.xlu0 0
    %146 = vperm.xlu0 %145, %v34
    %v147 = vpop.permute.xlu0 %146
    %150 = vset.pattern.permute.xlu0 0
    %151 = vperm.xlu0 %150, %v35
    %v152 = vpop.permute.xlu0 %151
    %155 = vset.pattern.permute.xlu0 0
    %156 = vperm.xlu0 %155, %v36
    %v157 = vpop.permute.xlu0 %156
    %160 = vset.pattern.permute.xlu0 0
    %161 = vperm.xlu0 %160, %v37
    %v162 = vpop.permute.xlu0 %161
    %165 = vset.pattern.permute.xlu0 0
    %166 = vperm.xlu0 %165, %v38
    %v167 = vpop.permute.xlu0 %166
    %170 = vset.pattern.permute.xlu0 0
    %171 = vperm.xlu0 %170, %v39
    %v172 = vpop.permute.xlu0 %171
    %175 = vset.pattern.permute.xlu0 0
    %176 = vperm.xlu0 %175, %v40
    %v177 = vpop.permute.xlu0 %176
    %180 = vset.pattern.permute.xlu0 0
    %181 = vperm.xlu0 %180, %v41
    %v182 = vpop.permute.xlu0 %181
    %185 = vset.pattern.permute.xlu0 0
    %186 = vperm.xlu0 %185, %v42
    %v187 = vpop.permute.xlu0 %186
    %190 = vset.pattern.permute.xlu0 0
    %191 = vperm.xlu0 %190, %v43
    %v192 = vpop.permute.xlu0 %191
    %195 = vset.pattern.permute.xlu0 0
    %196 = vperm.xlu0 %195, %v44
    %v197 = vpop.permute.xlu0 %196
    %200 = vset.pattern.permute.xlu0 0
    %201 = vperm.xlu0 %200, %v45
    %v202 = vpop.permute.xlu0 %201
    %205 = vset.pattern.permute.xlu0 0
    %206 = vperm.xlu0 %205, %v46
    %v207 = vpop.permute.xlu0 %206
    %v209 = vlaneseq
    %v210 = vshrl.u32 %v209, 7
    %v211 = vsub.s32 0, %v210
    %v212 = vrot.slane %v47, %v211
    %v213 = vmul.f32 %v52, %v212
    %v214 = vmul.f32 %v57, %v212
    %v215 = vmul.f32 %v62, %v212
    %v216 = vmul.f32 %v67, %v212
    %v217 = vmul.f32 %v72, %v212
    %v218 = vmul.f32 %v77, %v212
    %v219 = vmul.f32 %v82, %v212
    %v220 = vmul.f32 %v87, %v212
    %v221 = vmul.f32 %v92, %v212
    %v222 = vmul.f32 %v97, %v212
    %v223 = vmul.f32 %v102, %v212
    %v224 = vmul.f32 %v107, %v212
    %v225 = vmul.f32 %v112, %v212
    %v226 = vmul.f32 %v117, %v212
    %v227 = vmul.f32 %v122, %v212
    %v228 = vmul.f32 %v127, %v212
    %v229 = vmul.f32 %v132, %v212
    %v230 = vmul.f32 %v137, %v212
    %v231 = vmul.f32 %v142, %v212
    %v232 = vmul.f32 %v147, %v212
    %v233 = vmul.f32 %v152, %v212
    %v234 = vmul.f32 %v157, %v212
    %v235 = vmul.f32 %v162, %v212
    %v236 = vmul.f32 %v167, %v212
    %v237 = vmul.f32 %v172, %v212
    %v238 = vmul.f32 %v177, %v212
    %v239 = vmul.f32 %v182, %v212
    %v240 = vmul.f32 %v187, %v212
    %v241 = vmul.f32 %v192, %v212
    %v242 = vmul.f32 %v197, %v212
    %v243 = vmul.f32 %v202, %v212
    %v244 = vmul.f32 %v207, %v212
    %v246 = vlaneseq
    %v247 = vshrl.u32 %v246, 7
    %v248 = vsub.s32 0, %v247
    %v249 = vrot.slane %v48, %v248
    %v251 = vadd.f32 %v249, %v213
    %v252 = vadd.f32 %v249, %v214
    %v253 = vadd.f32 %v249, %v215
    %v254 = vadd.f32 %v249, %v216
    %v255 = vadd.f32 %v249, %v217
    %v256 = vadd.f32 %v249, %v218
    %v257 = vadd.f32 %v249, %v219
    %v258 = vadd.f32 %v249, %v220
    %v259 = vadd.f32 %v249, %v221
    %v260 = vadd.f32 %v249, %v222
    %v261 = vadd.f32 %v249, %v223
    %v262 = vadd.f32 %v249, %v224
    %v263 = vadd.f32 %v249, %v225
    %v264 = vadd.f32 %v249, %v226
    %v265 = vadd.f32 %v249, %v227
    %v266 = vadd.f32 %v249, %v228
    %v267 = vadd.f32 %v249, %v229
    %v268 = vadd.f32 %v249, %v230
    %v269 = vadd.f32 %v249, %v231
    %v270 = vadd.f32 %v249, %v232
    %v271 = vadd.f32 %v249, %v233
    %v272 = vadd.f32 %v249, %v234
    %v273 = vadd.f32 %v249, %v235
    %v274 = vadd.f32 %v249, %v236
    %v275 = vadd.f32 %v249, %v237
    %v276 = vadd.f32 %v249, %v238
    %v277 = vadd.f32 %v249, %v239
    %v278 = vadd.f32 %v249, %v240
    %v279 = vadd.f32 %v249, %v241
    %v280 = vadd.f32 %v249, %v242
    %v281 = vadd.f32 %v249, %v243
    %v282 = vadd.f32 %v249, %v244
    %283 = vset.pattern.permute.xlu0 1
    %284 = vperm.xlu0 %283, %v15
    %v285 = vpop.permute.xlu0 %284
    %287 = vset.pattern.permute.xlu0 1
    %288 = vperm.xlu0 %287, %v16
    %v289 = vpop.permute.xlu0 %288
    %291 = vset.pattern.permute.xlu0 1
    %292 = vperm.xlu0 %291, %v17
    %v293 = vpop.permute.xlu0 %292
    %295 = vset.pattern.permute.xlu0 1
    %296 = vperm.xlu0 %295, %v18
    %v297 = vpop.permute.xlu0 %296
    %299 = vset.pattern.permute.xlu0 1
    %300 = vperm.xlu0 %299, %v19
    %v301 = vpop.permute.xlu0 %300
    %303 = vset.pattern.permute.xlu0 1
    %304 = vperm.xlu0 %303, %v20
    %v305 = vpop.permute.xlu0 %304
    %307 = vset.pattern.permute.xlu0 1
    %308 = vperm.xlu0 %307, %v21
    %v309 = vpop.permute.xlu0 %308
    %311 = vset.pattern.permute.xlu0 1
    %312 = vperm.xlu0 %311, %v22
    %v313 = vpop.permute.xlu0 %312
    %315 = vset.pattern.permute.xlu0 1
    %316 = vperm.xlu0 %315, %v23
    %v317 = vpop.permute.xlu0 %316
    %319 = vset.pattern.permute.xlu0 1
    %320 = vperm.xlu0 %319, %v24
    %v321 = vpop.permute.xlu0 %320
    %323 = vset.pattern.permute.xlu0 1
    %324 = vperm.xlu0 %323, %v25
    %v325 = vpop.permute.xlu0 %324
    %327 = vset.pattern.permute.xlu0 1
    %328 = vperm.xlu0 %327, %v26
    %v329 = vpop.permute.xlu0 %328
    %331 = vset.pattern.permute.xlu0 1
    %332 = vperm.xlu0 %331, %v27
    %v333 = vpop.permute.xlu0 %332
    %335 = vset.pattern.permute.xlu0 1
    %336 = vperm.xlu0 %335, %v28
    %v337 = vpop.permute.xlu0 %336
    %339 = vset.pattern.permute.xlu0 1
    %340 = vperm.xlu0 %339, %v29
    %v341 = vpop.permute.xlu0 %340
    %343 = vset.pattern.permute.xlu0 1
    %344 = vperm.xlu0 %343, %v30
    %v345 = vpop.permute.xlu0 %344
    %347 = vset.pattern.permute.xlu0 1
    %348 = vperm.xlu0 %347, %v31
    %v349 = vpop.permute.xlu0 %348
    %351 = vset.pattern.permute.xlu0 1
    %352 = vperm.xlu0 %351, %v32
    %v353 = vpop.permute.xlu0 %352
    %355 = vset.pattern.permute.xlu0 1
    %356 = vperm.xlu0 %355, %v33
    %v357 = vpop.permute.xlu0 %356
    %359 = vset.pattern.permute.xlu0 1
    %360 = vperm.xlu0 %359, %v34
    %v361 = vpop.permute.xlu0 %360
    %363 = vset.pattern.permute.xlu0 1
    %364 = vperm.xlu0 %363, %v35
    %v365 = vpop.permute.xlu0 %364
    %367 = vset.pattern.permute.xlu0 1
    %368 = vperm.xlu0 %367, %v36
    %v369 = vpop.permute.xlu0 %368
    %371 = vset.pattern.permute.xlu0 1
    %372 = vperm.xlu0 %371, %v37
    %v373 = vpop.permute.xlu0 %372
    %375 = vset.pattern.permute.xlu0 1
    %376 = vperm.xlu0 %375, %v38
    %v377 = vpop.permute.xlu0 %376
    %379 = vset.pattern.permute.xlu0 1
    %380 = vperm.xlu0 %379, %v39
    %v381 = vpop.permute.xlu0 %380
    %383 = vset.pattern.permute.xlu0 1
    %384 = vperm.xlu0 %383, %v40
    %v385 = vpop.permute.xlu0 %384
    %387 = vset.pattern.permute.xlu0 1
    %388 = vperm.xlu0 %387, %v41
    %v389 = vpop.permute.xlu0 %388
    %391 = vset.pattern.permute.xlu0 1
    %392 = vperm.xlu0 %391, %v42
    %v393 = vpop.permute.xlu0 %392
    %395 = vset.pattern.permute.xlu0 1
    %396 = vperm.xlu0 %395, %v43
    %v397 = vpop.permute.xlu0 %396
    %399 = vset.pattern.permute.xlu0 1
    %400 = vperm.xlu0 %399, %v44
    %v401 = vpop.permute.xlu0 %400
    %403 = vset.pattern.permute.xlu0 1
    %404 = vperm.xlu0 %403, %v45
    %v405 = vpop.permute.xlu0 %404
    %407 = vset.pattern.permute.xlu0 1
    %408 = vperm.xlu0 %407, %v46
    %v409 = vpop.permute.xlu0 %408
    %v411 = vlaneseq
    %v412 = vshrl.u32 %v411, 7
    %v413 = vsub.s32 1, %v412
    %v414 = vrot.slane %v47, %v413
    %v415 = vmul.f32 %v285, %v414
    %v416 = vmul.f32 %v289, %v414
    %v417 = vmul.f32 %v293, %v414
    %v418 = vmul.f32 %v297, %v414
    %v419 = vmul.f32 %v301, %v414
    %v420 = vmul.f32 %v305, %v414
    %v421 = vmul.f32 %v309, %v414
    %v422 = vmul.f32 %v313, %v414
    %v423 = vmul.f32 %v317, %v414
    %v424 = vmul.f32 %v321, %v414
    %v425 = vmul.f32 %v325, %v414
    %v426 = vmul.f32 %v329, %v414
    %v427 = vmul.f32 %v333, %v414
    %v428 = vmul.f32 %v337, %v414
    %v429 = vmul.f32 %v341, %v414
    %v430 = vmul.f32 %v345, %v414
    %v431 = vmul.f32 %v349, %v414
    %v432 = vmul.f32 %v353, %v414
    %v433 = vmul.f32 %v357, %v414
    %v434 = vmul.f32 %v361, %v414
    %v435 = vmul.f32 %v365, %v414
    %v436 = vmul.f32 %v369, %v414
    %v437 = vmul.f32 %v373, %v414
    %v438 = vmul.f32 %v377, %v414
    %v439 = vmul.f32 %v381, %v414
    %v440 = vmul.f32 %v385, %v414
    %v441 = vmul.f32 %v389, %v414
    %v442 = vmul.f32 %v393, %v414
    %v443 = vmul.f32 %v397, %v414
    %v444 = vmul.f32 %v401, %v414
    %v445 = vmul.f32 %v405, %v414
    %v446 = vmul.f32 %v409, %v414
    %v447 = vadd.f32 %v251, %v415
    %v448 = vadd.f32 %v252, %v416
    %v449 = vadd.f32 %v253, %v417
    %v450 = vadd.f32 %v254, %v418
    %v451 = vadd.f32 %v255, %v419
    %v452 = vadd.f32 %v256, %v420
    %v453 = vadd.f32 %v257, %v421
    %v454 = vadd.f32 %v258, %v422
    %v455 = vadd.f32 %v259, %v423
    %v456 = vadd.f32 %v260, %v424
    %v457 = vadd.f32 %v261, %v425
    %v458 = vadd.f32 %v262, %v426
    %v459 = vadd.f32 %v263, %v427
    %v460 = vadd.f32 %v264, %v428
    %v461 = vadd.f32 %v265, %v429
    %v462 = vadd.f32 %v266, %v430
    %v463 = vadd.f32 %v267, %v431
    %v464 = vadd.f32 %v268, %v432
    %v465 = vadd.f32 %v269, %v433
    %v466 = vadd.f32 %v270, %v434
    %v467 = vadd.f32 %v271, %v435
    %v468 = vadd.f32 %v272, %v436
    %v469 = vadd.f32 %v273, %v437
    %v470 = vadd.f32 %v274, %v438
    %v471 = vadd.f32 %v275, %v439
    %v472 = vadd.f32 %v276, %v440
    %v473 = vadd.f32 %v277, %v441
    %v474 = vadd.f32 %v278, %v442
    %v475 = vadd.f32 %v279, %v443
    %v476 = vadd.f32 %v280, %v444
    %v477 = vadd.f32 %v281, %v445
    %v478 = vadd.f32 %v282, %v446
    %v479 = vtanh.pop %v447
    %v480 = vtanh.pop %v448
    %v481 = vtanh.pop %v449
    %v482 = vtanh.pop %v450
    %v483 = vtanh.pop %v451
    %v484 = vtanh.pop %v452
    %v485 = vtanh.pop %v453
    %v486 = vtanh.pop %v454
    %v487 = vtanh.pop %v455
    %v488 = vtanh.pop %v456
    %v489 = vtanh.pop %v457
    %v490 = vtanh.pop %v458
    %v491 = vtanh.pop %v459
    %v492 = vtanh.pop %v460
    %v493 = vtanh.pop %v461
    %v494 = vtanh.pop %v462
    %v495 = vtanh.pop %v463
    %v496 = vtanh.pop %v464
    %v497 = vtanh.pop %v465
    %v498 = vtanh.pop %v466
    %v499 = vtanh.pop %v467
    %v500 = vtanh.pop %v468
    %v501 = vtanh.pop %v469
    %v502 = vtanh.pop %v470
    %v503 = vtanh.pop %v471
    %v504 = vtanh.pop %v472
    %v505 = vtanh.pop %v473
    %v506 = vtanh.pop %v474
    %v507 = vtanh.pop %v475
    %v508 = vtanh.pop %v476
    %v509 = vtanh.pop %v477
    %v510 = vtanh.pop %v478
    %511 = vst [vmem:[#allocation2] sm:$0xff] %v479
    %512 = vst [vmem:[#allocation2 + $0x8] sm:$0xff] %v480
    %513 = vst [vmem:[#allocation2 + $0x10] sm:$0xff] %v481
    %514 = vst [vmem:[#allocation2 + $0x18] sm:$0xff] %v482
    %515 = vst [vmem:[#allocation2 + $0x20] sm:$0xff] %v483
    %516 = vst [vmem:[#allocation2 + $0x28] sm:$0xff] %v484
    %517 = vst [vmem:[#allocation2 + $0x30] sm:$0xff] %v485
    %518 = vst [vmem:[#allocation2 + $0x38] sm:$0xff] %v486
    %519 = vst [vmem:[#allocation2 + $0x40] sm:$0xff] %v487
    %520 = vst [vmem:[#allocation2 + $0x48] sm:$0xff] %v488
    %521 = vst [vmem:[#allocation2 + $0x50] sm:$0xff] %v489
    %522 = vst [vmem:[#allocation2 + $0x58] sm:$0xff] %v490
    %523 = vst [vmem:[#allocation2 + $0x60] sm:$0xff] %v491
    %524 = vst [vmem:[#allocation2 + $0x68] sm:$0xff] %v492
    %525 = vst [vmem:[#allocation2 + $0x70] sm:$0xff] %v493
    %526 = vst [vmem:[#allocation2 + $0x78] sm:$0xff] %v494
    %527 = vst [vmem:[#allocation2 + $0x80] sm:$0xff] %v495
    %528 = vst [vmem:[#allocation2 + $0x88] sm:$0xff] %v496
    %529 = vst [vmem:[#allocation2 + $0x90] sm:$0xff] %v497
    %530 = vst [vmem:[#allocation2 + $0x98] sm:$0xff] %v498
    %531 = vst [vmem:[#allocation2 + $0xa0] sm:$0xff] %v499
    %532 = vst [vmem:[#allocation2 + $0xa8] sm:$0xff] %v500
    %533 = vst [vmem:[#allocation2 + $0xb0] sm:$0xff] %v501
    %534 = vst [vmem:[#allocation2 + $0xb8] sm:$0xff] %v502
    %535 = vst [vmem:[#allocation2 + $0xc0] sm:$0xff] %v503
    %536 = vst [vmem:[#allocation2 + $0xc8] sm:$0xff] %v504
    %537 = vst [vmem:[#allocation2 + $0xd0] sm:$0xff] %v505
    %538 = vst [vmem:[#allocation2 + $0xd8] sm:$0xff] %v506
    %539 = vst [vmem:[#allocation2 + $0xe0] sm:$0xff] %v507
    %540 = vst [vmem:[#allocation2 + $0xe8] sm:$0xff] %v508
    %541 = vst [vmem:[#allocation2 + $0xf0] sm:$0xff] %v509
    %542 = vst [vmem:[#allocation2 + $0xf8] sm:$0xff] %v510
    // Predicated region
    $region14: #{rfm_forward_folded.1} parent=1 // pred_check
      _
    $region15: #{rfm_forward_folded.1} parent=1 // pred_check_branch
      %544 = sbr.rel (0) target = $region17
    $region16: #{rfm_forward_folded.1} parent=1 // pred_region
      %s546 = ssub.s32 4096, 4096
      %547 = vsyncadd [#allocation3], %s546
      %s548 = sshll.u32 [#allocation2], 4
      %s549 = int_to_ptr.vmem [resolvable:$true] %s548
      %554 = dma.vmem_to_hbm [thread:$0]  %s549, 4096, %s3, [#allocation3], 128, 128, 8
    $region17: #{rfm_forward_folded.1} parent=1 // pred_fallthru
      _
    // Predicated region
    $region18: #{rfm_forward_folded.1} parent=1 // pred_check
      _
    $region19: #{rfm_forward_folded.1} parent=1 // pred_check_branch
      %556 = sbr.rel (0) target = $region21
    $region20: #{rfm_forward_folded.1} parent=1 // pred_region
      %557 = dma.done [#allocation3], 4096
    $region21: #{rfm_forward_folded.1} parent=1 // pred_fallthru
      _
    %558 = vsyncpa [#allocation3], 1

</llo_original>
